<compile_context>
chip_gen: v7x
topology: tpu7x:2x2x1
jax: 0.10.0
libtpu: 0.0.40
codegen_flags: <defaults>
</compile_context>

<pallas_src>
import functools

import numpy as np
import jax
import jax.numpy as jnp
from jax import lax
from jax.experimental import pallas as pl
from jax.experimental.pallas import tpu as pltpu


def _round_up(x, m):
    return ((x + m - 1) // m) * m


def _vmem_capacity_bytes():
    try:
        return int(pltpu.get_tpu_info().vmem_capacity_bytes)
    except Exception:
        return 64 << 20           # conservative fallback = v7x per-TC VMEM


def _choose_seq_tile(S, TB, D, per_buffer_budget, elem_bytes):
    """Largest seq tile (multiple of 8, preferring an exact divisor of S) whose
    [TB, TS, D] slab fits per_buffer_budget."""
    row_bytes = max(1, TB * D * elem_bytes)
    if S * row_bytes <= per_buffer_budget:
        return S                                   # one full-S tile
    max_ts = max(8, (per_buffer_budget // row_bytes) // 8 * 8)
    max_ts = min(max_ts, _round_up(S, 8))
    # Prefer a tile that divides S exactly (no ragged tail), but don't shrink
    # the tile by more than ~2x to get it.
    for ts in range(max_ts, max(7, max_ts // 2), -8):
        if S % ts == 0:
            return ts
    return max_ts


def mce_head_kernel(hs_ref, w_ref, b_ref, out_ref, acc_ref, *,
                    inv_seq_len, seq_len, seq_tile, need_tail_mask):
    # hs_ref: [TB, TS, D] hidden-state tile (f32, read straight from HBM)
    # w_ref:  [D, Cp] bf16    b_ref: [1, Cp] bf16
    # out_ref: [TB, Cp] f32   acc_ref: [TB, D] f32 running sum over S
    j = pl.program_id(1)

    @pl.when(j == 0)
    def _init():
        acc_ref[...] = jnp.zeros_like(acc_ref)

    hs = hs_ref[...]                                        # [TB, TS, D]
    if need_tail_mask:
        # Select (not multiply): stale-VMEM NaNs in the OOB tail stay inert.
        pos = j * seq_tile + lax.broadcasted_iota(jnp.int32, hs.shape, 1)
        hs = jnp.where(pos < seq_len, hs, jnp.array(0.0, hs.dtype))
    acc_ref[...] += jnp.sum(hs, axis=1).astype(acc_ref.dtype)

    @pl.when(j == pl.num_programs(1) - 1)
    def _epilogue():
        pooled = (acc_ref[...] * inv_seq_len).astype(w_ref.dtype)   # [TB, D]
        x = jnp.dot(pooled, w_ref[...], preferred_element_type=jnp.float32)
        x = x + b_ref[...].astype(jnp.float32)
        out_ref[...] = jnp.tanh(x).astype(out_ref.dtype)


def mce_head(hidden_states, w, b, *, seq_tile=None):
    """tanh(Linear(mean_seq(hidden_states))) per batch row, via Pallas."""
    B, S, D = hidden_states.shape
    C = w.shape[1]
    elem_bytes = jnp.dtype(hidden_states.dtype).itemsize

    TB = 8 if B >= 8 else B                  # output-block sublane constraint
    Cp = _round_up(C, 128)                   # lane-dense output stores

    # Generation-aware VMEM budget (v7x: 64 MiB/TC, v5e/v6e: 128 MiB).
    cap = _vmem_capacity_bytes()
    total_budget = min(int(cap * 0.70), 48 << 20)
    tb8 = _round_up(TB, 8)
    fixed = (2 * D * Cp * 2                  # double-buffered bf16 W
             + 2 * 8 * Cp * 2                # double-buffered bf16 b (padded)
             + 2 * tb8 * Cp * 4              # double-buffered f32 out block
             + tb8 * _round_up(D, 128) * 4)  # f32 accumulator scratch
    # /3: two pipeline buffers + one tile-sized intermediate the compiler may
    # materialize for the (optionally masked) reduce.
    hs_budget = max(1 << 20, (total_budget - fixed) // 3)
    TS = seq_tile if seq_tile is not None else _choose_seq_tile(
        S, TB, D, hs_budget, elem_bytes)
    need_tail_mask = (S % TS) != 0

    # W / b are tiny; pad classes to Cp and keep them bf16 (MXU-native).
    w_p = jnp.zeros((D, Cp), jnp.bfloat16).at[:, :C].set(w.astype(jnp.bfloat16))
    b_p = jnp.zeros((1, Cp), jnp.bfloat16).at[0, :C].set(b.astype(jnp.bfloat16))

    est_bytes = fixed + 3 * TB * TS * D * elem_bytes
    vmem_limit = int(min(cap * 0.85, max(est_bytes + (8 << 20), 32 << 20)))

    kernel = functools.partial(
        mce_head_kernel, inv_seq_len=1.0 / S, seq_len=S, seq_tile=TS,
        need_tail_mask=need_tail_mask)

    out = pl.pallas_call(
        kernel,
        out_shape=jax.ShapeDtypeStruct((B, Cp), jnp.float32),
        grid_spec=pltpu.PrefetchScalarGridSpec(
            num_scalar_prefetch=0,
            grid=(pl.cdiv(B, TB), pl.cdiv(S, TS)),
            in_specs=[
                pl.BlockSpec((TB, TS, D), lambda i, j: (i, j, 0)),
                pl.BlockSpec((D, Cp), lambda i, j: (0, 0)),
                pl.BlockSpec((1, Cp), lambda i, j: (0, 0)),
            ],
            out_specs=pl.BlockSpec((TB, Cp), lambda i, j: (i, 0)),
            scratch_shapes=[pltpu.VMEM((TB, D), jnp.float32)],
        ),
        # NOTE: with a single batch tile (small B) only one TensorCore is fed
        # on v7x; a two-pass S-split (per-core partial sums + tiny combine)
        # would be needed to occupy both cores for this HBM-bound head.
        compiler_params=pltpu.CompilerParams(
            dimension_semantics=("parallel", "arbitrary"),
            vmem_limit_bytes=vmem_limit),
    )(hidden_states, w_p, b_p)

    return out[:, :C]


def init_params(key, vocab_size, model_dim, classification_dim):
    k_emb, k_w, k_b = jax.random.split(key, 3)
    # nn.Linear(model_dim, classification_dim): weight [C, D], bias [C].
    # Stored transposed as [D, C].
    bound = 1.0 / np.sqrt(model_dim)
    return {
        "embedding": jax.random.normal(k_emb, (vocab_size, model_dim),
                                       dtype=jnp.float32) * 0.02,
        "w": jax.random.uniform(k_w, (model_dim, classification_dim),
                                minval=-bound, maxval=bound, dtype=jnp.float32),
        "b": jax.random.uniform(k_b, (classification_dim,),
                                minval=-bound, maxval=bound, dtype=jnp.float32),
    }


def mce_forward(params, input_ids, attention_mask, labels, labels_classification):
    # TODO(synk): the wrapped mT5 seq2seq forward (which consumes attention_mask
    # and labels internally) and its LM loss have no clean Pallas equivalent;
    # the encoder is stubbed with a deterministic embedding lookup and `loss`
    # is returned as 0.0.
    del attention_mask, labels
    hs = jnp.take(params["embedding"], input_ids, axis=0)            # [B, S, D]
    loss = jnp.float32(0.0)

    # Static-shaped head over the full batch; the boolean batch selection
    # (hidden[labels_classification == 1]) commutes with the per-row head, so
    # it is applied to the tiny [B, C] output.
    x_all = mce_head(hs, params["w"], params["b"])                   # [B, C]
    sel_idx = np.nonzero(np.asarray(labels_classification) == 1)[0]
    x = x_all[sel_idx]
    return loss, x


if __name__ == "__main__":
    # ---- MCE forward demo (stubbed encoder) --------------------------------
    B, S, D, C, V = 2, 8, 32, 4, 64   # batch, seq, model_dim, class_dim, vocab

    key = jax.random.PRNGKey(0)
    k_params, k_ids = jax.random.split(key)
    params = init_params(k_params, V, D, C)

    input_ids = jax.random.randint(k_ids, (B, S), 0, V, dtype=jnp.int32)
    attention_mask = jnp.ones((B, S), dtype=jnp.int32)
    labels = jax.random.randint(jax.random.PRNGKey(1), (B, S), 0, V,
                                dtype=jnp.int32)
    labels_classification = np.array([1, 1], dtype=np.int32)

    loss, x = mce_forward(params, input_ids, attention_mask, labels,
                          labels_classification)
    x = jax.block_until_ready(x)
    loss = jax.block_until_ready(loss)

    # Pure-JAX reference (same stubbed encoder; PyTorch does a plain seq mean).
    hs_ref = jnp.take(params["embedding"], input_ids, axis=0)
    sel = np.nonzero(labels_classification == 1)[0]
    pooled_ref = jnp.mean(hs_ref[sel], axis=1)
    x_ref = np.asarray(jnp.tanh(pooled_ref @ params["w"] + params["b"]))

    assert x.shape == (len(sel), C)
    assert bool(jnp.all(jnp.isfinite(x)))
    assert np.allclose(np.asarray(x), x_ref, atol=1e-2, rtol=1e-2), \
        float(np.max(np.abs(np.asarray(x) - x_ref)))

    # ---- Tiled / ragged-tail path check (multi-step reduction) -------------
    # 40 % 16 != 0 exercises the in-kernel iota/where tail select; 12 % 8 != 0
    # exercises the ragged batch tile whose garbage rows are dropped.
    B2, S2, D2, C2 = 12, 40, 256, 4
    kh = jax.random.split(jax.random.PRNGKey(2), 3)
    hs2 = jax.random.normal(kh[0], (B2, S2, D2), dtype=jnp.float32)
    w2 = jax.random.normal(kh[1], (D2, C2), dtype=jnp.float32) / np.sqrt(D2)
    b2 = jax.random.normal(kh[2], (C2,), dtype=jnp.float32) * 0.1
    y = jax.block_until_ready(mce_head(hs2, w2, b2, seq_tile=16))
    y_ref = np.asarray(jnp.tanh(jnp.mean(hs2, axis=1) @ w2 + b2))
    assert y.shape == (B2, C2)
    assert np.allclose(np.asarray(y), y_ref, atol=1e-2, rtol=1e-2), \
        float(np.max(np.abs(np.asarray(y) - y_ref)))

    print("KERNEL_OK")
</pallas_src>

<mosaic_0001>
module attributes {stable_mosaic.version = 11 : i64} {
  func.func @mce_head_kernel(%arg0: i32, %arg1: i32, %arg2: memref<2x8x32xf32, #tpu.memory_space<vmem>>, %arg3: memref<32x128xbf16, #tpu.memory_space<vmem>>, %arg4: memref<1x128xbf16, #tpu.memory_space<vmem>>, %arg5: memref<2x128xf32, #tpu.memory_space<vmem>>, %arg6: memref<2x32xf32, #tpu.memory_space<vmem>>) attributes {dimension_semantics = [#tpu.dimension_semantics<parallel>, #tpu.dimension_semantics<arbitrary>], iteration_bounds = array<i64: 1, 1>, scalar_prefetch = 0 : i64, scratch_operands = 1 : i64, tpu.core_type = #tpu.core_type<tc>, window_params = [{transform_indices = @transform_0, window_bounds = array<i64: 2, 8, 32>}, {pipeline_mode = #tpu.pipeline_mode<synchronous>, transform_indices = @transform_1, window_bounds = array<i64: 32, 128>}, {pipeline_mode = #tpu.pipeline_mode<synchronous>, transform_indices = @transform_2, window_bounds = array<i64: 1, 128>}, {transform_indices = @transform_3, window_bounds = array<i64: 2, 128>}]} {
    %c0_i32 = arith.constant 0 : i32
    %0 = arith.cmpi eq, %arg1, %c0_i32 : i32
    %1 = arith.extui %0 : i1 to i32
    %c0_i32_0 = arith.constant 0 : i32
    %2 = arith.cmpi ne, %1, %c0_i32_0 : i32
    scf.if %2 {
      %cst_9 = arith.constant 0.000000e+00 : f32
      %11 = vector.broadcast %cst_9 : f32 to vector<2x32xf32>
      %c0_10 = arith.constant 0 : index
      %c0_11 = arith.constant 0 : index
      %12 = vector.load %arg6[%c0_10, %c0_11] : memref<2x32xf32, #tpu.memory_space<vmem>>, vector<2x32xf32>
      tpu.vector_store %arg6[%c0_10, %c0_11], %11 {strides = array<i32>} : memref<2x32xf32, #tpu.memory_space<vmem>>, vector<2x32xf32>,
    } else {
    }
    %c0 = arith.constant 0 : index
    %c0_1 = arith.constant 0 : index
    %c0_2 = arith.constant 0 : index
    %3 = vector.load %arg2[%c0, %c0_1, %c0_2] : memref<2x8x32xf32, #tpu.memory_space<vmem>>, vector<2x8x32xf32>
    %c0_3 = arith.constant 0 : index
    %c0_4 = arith.constant 0 : index
    %4 = vector.load %arg6[%c0_3, %c0_4] : memref<2x32xf32, #tpu.memory_space<vmem>>, vector<2x32xf32>
    %cst = arith.constant dense<0.000000e+00> : vector<2x32xf32>
    %5 = vector.multi_reduction <add>, %3, %cst [1] : vector<2x8x32xf32> to vector<2x32xf32>
    %6 = arith.addf %4, %5 : vector<2x32xf32>
    %c0_5 = arith.constant 0 : index
    %c0_6 = arith.constant 0 : index
    %7 = vector.load %arg6[%c0_5, %c0_6] : memref<2x32xf32, #tpu.memory_space<vmem>>, vector<2x32xf32>
    tpu.vector_store %arg6[%c0_5, %c0_6], %6 {strides = array<i32>} : memref<2x32xf32, #tpu.memory_space<vmem>>, vector<2x32xf32>,
    %c0_i32_7 = arith.constant 0 : i32
    %8 = arith.cmpi eq, %arg1, %c0_i32_7 : i32
    %9 = arith.extui %8 : i1 to i32
    %c0_i32_8 = arith.constant 0 : i32
    %10 = arith.cmpi ne, %9, %c0_i32_8 : i32
    scf.if %10 {
      %c0_9 = arith.constant 0 : index
      %c0_10 = arith.constant 0 : index
      %11 = vector.load %arg6[%c0_9, %c0_10] : memref<2x32xf32, #tpu.memory_space<vmem>>, vector<2x32xf32>
      %cst_11 = arith.constant 1.250000e-01 : f32
      %12 = vector.broadcast %cst_11 : f32 to vector<2x32xf32>
      %13 = arith.mulf %11, %12 : vector<2x32xf32>
      %14 = arith.truncf %13 : vector<2x32xf32> to vector<2x32xbf16>
      %c0_12 = arith.constant 0 : index
      %c0_13 = arith.constant 0 : index
      %15 = vector.load %arg3[%c0_12, %c0_13] : memref<32x128xbf16, #tpu.memory_space<vmem>>, vector<32x128xbf16>
      %cst_14 = arith.constant dense<0.000000e+00> : vector<2x128xf32>
      %16 = tpu.matmul %14, %15, %cst_14 {dimension_numbers = #tpu.dot_dimension_numbers<[1], [0], [0], [1], [0, 0, 1, 1], [], []>} : vector<2x32xbf16>, vector<32x128xbf16>, vector<2x128xf32> -> vector<2x128xf32>
      %c0_15 = arith.constant 0 : index
      %c0_16 = arith.constant 0 : index
      %17 = vector.load %arg4[%c0_15, %c0_16] : memref<1x128xbf16, #tpu.memory_space<vmem>>, vector<1x128xbf16>
      %18 = arith.extf %17 : vector<1x128xbf16> to vector<1x128xf32>
      %19 = vector.broadcast %18 : vector<1x128xf32> to vector<2x128xf32>
      %20 = arith.addf %16, %19 : vector<2x128xf32>
      %21 = math.tanh %20 : vector<2x128xf32>
      %c0_17 = arith.constant 0 : index
      %c0_18 = arith.constant 0 : index
      %22 = vector.load %arg5[%c0_17, %c0_18] : memref<2x128xf32, #tpu.memory_space<vmem>>, vector<2x128xf32>
      tpu.vector_store %arg5[%c0_17, %c0_18], %21 {strides = array<i32>} : memref<2x128xf32, #tpu.memory_space<vmem>>, vector<2x128xf32>,
    } else {
    }
    return
  }
  func.func @transform_0(%arg0: i32, %arg1: i32) -> (i32, i32, i32) {
    %c0_i32 = arith.constant 0 : i32
    %c0_i32_0 = arith.constant 0 : i32
    return %arg0, %arg1, %c0_i32 : i32, i32, i32
  }
  func.func @transform_1(%arg0: i32, %arg1: i32) -> (i32, i32) {
    %c0_i32 = arith.constant 0 : i32
    %c0_i32_0 = arith.constant 0 : i32
    %c0_i32_1 = arith.constant 0 : i32
    return %c0_i32, %c0_i32_0 : i32, i32
  }
  func.func @transform_2(%arg0: i32, %arg1: i32) -> (i32, i32) {
    %c0_i32 = arith.constant 0 : i32
    %c0_i32_0 = arith.constant 0 : i32
    %c0_i32_1 = arith.constant 0 : i32
    return %c0_i32, %c0_i32_0 : i32, i32
  }
  func.func @transform_3(%arg0: i32, %arg1: i32) -> (i32, i32) {
    %c0_i32 = arith.constant 0 : i32
    %c0_i32_0 = arith.constant 0 : i32
    return %arg0, %c0_i32 : i32, i32
  }
}

</mosaic_0001>

<llo_original>
// kernel: tpu_custom_call.1
$region0: #{tpu_custom_call.1}
  #allocation0 [shape = 'u32[]', space=smem, size = 0x4, offset = 0x4, fixed_abs, tag = 'smem constant byte address 0x4 - core index']
  #allocation1 [shape = 'u32[144,128]{1,0:T(1,128)}', space=vmem, size = 0x12000, scoped, tag = 'internal scratch']
  #allocation2 [shape = 'f32[2,32]{1,0:T(2,128)}', space=vmem, size = 0x400, scoped, tag = 'scratch operand']
  %s0 = inlined_call_operand.hbm [shape: f32[2,8,32], index: 0, kind: input, shape index: {}]
  %s1 = inlined_call_operand.hbm [shape: bf16[32,128], index: 1, kind: input, shape index: {}]
  %s2 = inlined_call_operand.vmem [shape: bf16[1,128], index: 2, kind: input, shape index: {}]
  %s3 = inlined_call_operand.hbm [shape: f32[2,128], index: 3, kind: output, shape index: {}]
  %s4 = sld [smem:[#allocation0]]
  $region38: #{tpu_custom_call.1} parent=0
    _
  %s6 = ssub.s32 1, %s4
  %s7 = scalar_select 0, %s6, %s4
  $region1: #{tpu_custom_call.1} parent=0
    #allocation3 [shape = 'u8[8192]{0}', space=vmem, size = 0x2000, scoped, tag = 'input window, operand 0, single buffered']
    #allocation4 [shape = 's32[1]{0}', space=sflag, size = 0x4, scoped, tag = 'scoped memory for tpu_custom_call.1']
    #allocation5 [shape = 's32[1]{0}', space=sflag, size = 0x4, scoped, tag = 'scoped memory for tpu_custom_call.1']
    #allocation6 [shape = 'u8[8192]{0}', space=vmem, size = 0x2000, scoped, tag = 'input window, operand 1, single buffered']
    #allocation7 [shape = 's32[1]{0}', space=sflag, size = 0x4, scoped, tag = 'scoped memory for tpu_custom_call.1']
    #allocation8 [shape = 'u8[1024]{0}', space=vmem, size = 0x400, scoped, tag = 'output window, operand 0, single buffered']
    %8 = vsyncpa [#allocation4], 0
    %9 = vsyncpa [#allocation7], 0
    %10 = vsyncpa [#allocation5], 0
    // Predicated region
    $region2: #{tpu_custom_call.1} parent=1 // pred_check
      _
    $region3: #{tpu_custom_call.1} parent=1 // pred_check_branch
      %12 = sbr.rel (0) target = $region5
    $region4: #{tpu_custom_call.1} parent=1 // pred_region
      %s14 = ssub.s32 256, 256
      %15 = vsyncadd [#allocation4], %s14
      %s16 = sshll.u32 [#allocation3], 4
      %s17 = int_to_ptr.vmem [resolvable:$true] %s16
      %22 = dma.hbm_to_vmem [thread:$0]  %s0, 256, %s17, [#allocation4], 128, 128, 8
    $region5: #{tpu_custom_call.1} parent=1 // pred_fallthru
      _
    // Predicated region
    $region6: #{tpu_custom_call.1} parent=1 // pred_check
      _
    $region7: #{tpu_custom_call.1} parent=1 // pred_check_branch
      %24 = sbr.rel (0) target = $region9
    $region8: #{tpu_custom_call.1} parent=1 // pred_region
      %s26 = ssub.s32 256, 256
      %27 = vsyncadd [#allocation7], %s26
      %s28 = sshll.u32 [#allocation6], 4
      %s29 = int_to_ptr.vmem [resolvable:$true] %s28
      %34 = dma.hbm_to_vmem [thread:$0]  %s1, 256, %s29, [#allocation7], 64, 64, 4
    $region9: #{tpu_custom_call.1} parent=1 // pred_fallthru
      _
    // Predicated region
    $region10: #{tpu_custom_call.1} parent=1 // pred_check
      _
    $region11: #{tpu_custom_call.1} parent=1 // pred_check_branch
      %36 = sbr.rel (0) target = $region13
    $region12: #{tpu_custom_call.1} parent=1 // pred_region
      _
    $region13: #{tpu_custom_call.1} parent=1 // pred_fallthru
      _
    // Predicated region
    $region14: #{tpu_custom_call.1} parent=1 // pred_check
      _
    $region15: #{tpu_custom_call.1} parent=1 // pred_check_branch
      %38 = sbr.rel (0) target = $region17
    $region16: #{tpu_custom_call.1} parent=1 // pred_region
      %39 = dma.done [#allocation4], 256
    $region17: #{tpu_custom_call.1} parent=1 // pred_fallthru
      _
    // Predicated region
    $region18: #{tpu_custom_call.1} parent=1 // pred_check
      _
    $region19: #{tpu_custom_call.1} parent=1 // pred_check_branch
      %41 = sbr.rel (0) target = $region21
    $region20: #{tpu_custom_call.1} parent=1 // pred_region
      %42 = dma.done [#allocation7], 256
    $region21: #{tpu_custom_call.1} parent=1 // pred_fallthru
      _
    %p44 = scmp.eq.s32.totalorder 0, 0
    // Predicated region
    $region22: #{tpu_custom_call.1} parent=1 // pred_check
      %p45 = pneg %p44
    $region23: #{tpu_custom_call.1} parent=1 // pred_check_branch
      %47 = sbr.rel (%p45) target = $region25
    $region24: #{tpu_custom_call.1} parent=1 // pred_region
      %vm48 = vcmask 254976
      %49 = vst.msk [vmem:[#allocation2] sm:$0x3] %vm48, 0.0
    $region25: #{tpu_custom_call.1} parent=1 // pred_fallthru
      _
    %v50 = vld [vmem:[#allocation3] sm:$0xff]
    %v51 = vld [vmem:[#allocation3 + $0x8] sm:$0xff]
    %v52 = vld [vmem:[#allocation2] sm:$0x3]
    %vm53 = vcmask 261120
    %v54 = vsel %vm53, %v50, 0.0
    %v55 = vrot.slane %v54, 4
    %v56 = vadd.f32 %v54, %v55
    %v57 = vrot.slane %v56, 2
    %v58 = vadd.f32 %v56, %v57
    %v59 = vrot.slane %v58, 1
    %v60 = vadd.f32 %v58, %v59
    %v61 = vsel %vm53, %v51, 0.0
    %v62 = vrot.slane %v61, 4
    %v63 = vadd.f32 %v61, %v62
    %v64 = vrot.slane %v63, 2
    %v65 = vadd.f32 %v63, %v64
    %v66 = vrot.slane %v65, 1
    %v67 = vadd.f32 %v65, %v66
    %vm70 = vcmask 1041409
    %v71 = vsel %vm70, %v67, %v60
    %v73 = vadd.f32 %v52, %v71
    %vm74 = vcmask 254976
    %75 = vst.msk [vmem:[#allocation2] sm:$0x3] %vm74, %v73
    // Predicated region
    $region26: #{tpu_custom_call.1} parent=1 // pred_check
      %p76 = pneg %p44
    $region27: #{tpu_custom_call.1} parent=1 // pred_check_branch
      %78 = sbr.rel (%p76) target = $region29
    $region28: #{tpu_custom_call.1} parent=1 // pred_region
      %v79 = vld [vmem:[#allocation2] sm:$0x3]
      %v80 = vmul.f32 %v79, 0.125
      %v81 = vpack.c.bf16 %v80, %v80
      %v82 = vld [vmem:[#allocation6] sm:$0xf]
      %v83 = vld [vmem:[#allocation6 + $0x4] sm:$0xf]
      %v84 = vld [vmem:[#allocation6 + $0x8] sm:$0xf]
      %v85 = vld [vmem:[#allocation6 + $0xc] sm:$0xf]
      %v86 = vld [vmem:[%s2] sm:$0x1]
      %v87 = vunpack.c.l.bf16 %v86
      %v88 = vlaneseq
      %v89 = vshrl.u32 %v88, 7
      %v90 = vsub.s32 0, %v89
      %v91 = vrot.slane %v87, %v90
      %v96 = vunpack.c.l.b16 %v82
      %v97 = vunpack.c.l.b16 %v83
      %v98 = vunpack.c.l.b16 %v84
      %v99 = vunpack.c.l.b16 %v85
      %v100 = vpack.c.b16 %v97, %v96
      %v101 = vpack.c.b16 %v99, %v98
      %v105 = vsel %vm53, %v81, 0
      %107 = vmatprep.subr.bf16.mxu0 0
      %108 = vmatpush1.bf16.msra.mxu0 %v100
      %109 = vmatprep.subr.bf16.mxu0 0
      %110 = vmatpush1.bf16.msra.mxu0 %v101
      %111 = vmatprep.subr.bf16.mxu0 0
      %112 = vmatpush1.bf16.msra.mxu0 0
      %113 = vmatprep.subr.bf16.mxu0 0
      %114 = vmatpush1.bf16.msra.mxu0 0
      %115 = vmatprep.subr.bf16.mxu0 0
      %116 = vmatpush1.bf16.msra.mxu0 0
      %117 = vmatprep.subr.bf16.mxu0 0
      %118 = vmatpush1.bf16.msra.mxu0 0
      %119 = vmatprep.subr.bf16.mxu0 0
      %120 = vmatpush1.bf16.msra.mxu0 0
      %121 = vmatprep.subr.bf16.mxu0 0
      %122 = vmatpush1.bf16.msra.mxu0 0
      %123 = vmatprep.subr.bf16.mxu0 0
      %124 = vmatpush1.bf16.msra.mxu0 0
      %125 = vmatprep.subr.bf16.mxu0 0
      %126 = vmatpush1.bf16.msra.mxu0 0
      %127 = vmatprep.subr.bf16.mxu0 0
      %128 = vmatpush1.bf16.msra.mxu0 0
      %129 = vmatprep.subr.bf16.mxu0 0
      %130 = vmatpush1.bf16.msra.mxu0 0
      %131 = vmatprep.subr.bf16.mxu0 0
      %132 = vmatpush1.bf16.msra.mxu0 0
      %133 = vmatprep.subr.bf16.mxu0 0
      %134 = vmatpush1.bf16.msra.mxu0 0
      %135 = vmatprep.subr.bf16.mxu0 0
      %136 = vmatpush1.bf16.msra.mxu0 0
      %137 = vmatprep.subr.bf16.mxu0 0
      %138 = vmatpush1.bf16.msra.mxu0 0
      %139 = vmatprep.mubr.bf16.mxu0 0
      %140 = vmatmul.mubr.bf16.gmra.mrb[0].mxu0 %v105
      %v141 = vpop.f32.mrb[0].mxu0
      %v142 = vadd.f32 %v91, %v141
      %v143 = vpop.f32.mrb[0].mxu0
      %v144 = vpop.f32.mrb[0].mxu0
      %v145 = vpop.f32.mrb[0].mxu0
      %146 = vdwg.mxu0
      %v147 = vtanh.pop %v142
      %148 = vst [vmem:[#allocation8] sm:$0x3] %v147
    $region29: #{tpu_custom_call.1} parent=1 // pred_fallthru
      _
    // Predicated region
    $region30: #{tpu_custom_call.1} parent=1 // pred_check
      _
    $region31: #{tpu_custom_call.1} parent=1 // pred_check_branch
      %150 = sbr.rel (0) target = $region33
    $region32: #{tpu_custom_call.1} parent=1 // pred_region
      %s152 = ssub.s32 32, 32
      %153 = vsyncadd [#allocation5], %s152
      %s155 = sshll.u32 [#allocation8], 4
      %s156 = int_to_ptr.vmem [resolvable:$true] %s155
      %158 = dma.vmem_to_hbm [thread:$0]  %s156, 32, %s3, [#allocation5]
    $region33: #{tpu_custom_call.1} parent=1 // pred_fallthru
      _
    // Predicated region
    $region34: #{tpu_custom_call.1} parent=1 // pred_check
      _
    $region35: #{tpu_custom_call.1} parent=1 // pred_check_branch
      %160 = sbr.rel (0) target = $region37
    $region36: #{tpu_custom_call.1} parent=1 // pred_region
      %161 = dma.done [#allocation5], 32
    $region37: #{tpu_custom_call.1} parent=1 // pred_fallthru
      _
    %162 = vsyncpa [#allocation4], 1
    %163 = vsyncpa [#allocation7], 1
    %164 = vsyncpa [#allocation5], 1

</llo_original>
